<compile_context>
chip_gen: v7x
topology: tpu7x:2x2x1
jax: 0.10.0
libtpu: 0.0.40
codegen_flags: <defaults>
</compile_context>

<pallas_src>
import jax
import jax.numpy as jnp
from jax.experimental import pallas as pl
from jax.experimental.pallas import tpu as pltpu

K = 5     # conv kernel size
PAD = 2   # padding=2 -> "same" output length


def conv1d_kernel(x_ref, w_ref, b_ref, o_ref, xp_ref):
    # x_ref : (B, C_in, L)          input, VMEM, NCL layout (L on lanes)
    # w_ref : (C_out*C_in*K,)       flattened conv weights, SMEM scalars
    # b_ref : (C_out,)              bias, SMEM scalars
    # o_ref : (B, C_out, L)         output, VMEM, NCL layout
    # xp_ref: (B, C_in, L+2*PAD)    VMEM scratch holding the zero-haloed input
    B, C_in, L = x_ref.shape
    C_out = o_ref.shape[1]

    # Build the zero-padded input once in VMEM (halo handled in-kernel, no
    # wrapper-side jnp.pad / transpose round trips through HBM).
    xp_ref[...] = jnp.zeros_like(xp_ref)
    xp_ref[:, :, PAD:PAD + L] = x_ref[...].astype(jnp.float32)

    # Pre-slice the K shifted views of every input channel once (reused for
    # every output channel): sh[i][k][b, l] == x[b, i, l + k - PAD] (0 outside).
    sh = [[xp_ref[:, i, k:k + L] for k in range(K)] for i in range(C_in)]

    # Pure-VPU conv: C_out * C_in * K scalar-broadcast FMAs on (B, L) tiles.
    for o in range(C_out):
        acc = jnp.full((B, L), b_ref[o], jnp.float32)      # bias folded into init
        for i in range(C_in):
            for k in range(K):
                acc = acc + w_ref[(o * C_in + i) * K + k] * sh[i][k]
        o_ref[:, o, :] = acc.astype(o_ref.dtype)


def conv1d_pallas(x_ncl, weight, bias):
    """x_ncl: (B, C, L); weight: (C_out, C_in, K); bias: (C_out,). Returns (B, C_out, L)."""
    B, C, L = x_ncl.shape
    C_out, C_in, Kw = weight.shape
    assert Kw == K and C_in == C and C_out == C

    # Row-major flatten (no data movement): index (o*C_in + i)*K + k.
    w_flat = weight.reshape(-1)

    return pl.pallas_call(
        conv1d_kernel,
        out_shape=jax.ShapeDtypeStruct((B, C_out, L), x_ncl.dtype),
        in_specs=[
            pl.BlockSpec(memory_space=pltpu.MemorySpace.VMEM),   # x  (whole array)
            pl.BlockSpec(memory_space=pltpu.MemorySpace.SMEM),   # weights (scalars)
            pl.BlockSpec(memory_space=pltpu.MemorySpace.SMEM),   # bias    (scalars)
        ],
        out_specs=pl.BlockSpec(memory_space=pltpu.MemorySpace.VMEM),
        scratch_shapes=[pltpu.VMEM((B, C, L + 2 * PAD), jnp.float32)],
    )(x_ncl, w_flat, bias)


if __name__ == "__main__":
    # Small shapes consistent with the module: batch=2, channels=4, length=16.
    B, C, L = 2, 4, 16

    key = jax.random.PRNGKey(0)
    kx, kw, kb = jax.random.split(key, 3)

    x = jax.random.normal(kx, (B, C, L), dtype=jnp.float32)
    # Deterministic init mimicking nn.Conv1d default (uniform in +/- 1/sqrt(C*K)).
    bound = 1.0 / jnp.sqrt(jnp.float32(C * K))
    weight = jax.random.uniform(kw, (C, C, K), jnp.float32, -bound, bound)
    bias = jax.random.uniform(kb, (C,), jnp.float32, -bound, bound)

    out = conv1d_pallas(x, weight, bias)
    jax.block_until_ready(out)

    # Cross-check against XLA's conv (same semantics as torch Conv1d).
    ref = jax.lax.conv_general_dilated(
        x, weight, window_strides=(1,), padding=((PAD, PAD),),
        dimension_numbers=("NCH", "OIH", "NCH"),
    ) + bias.reshape(1, C, 1)
    assert out.shape == (B, C, L)
    assert jnp.allclose(out, ref, atol=1e-5, rtol=1e-5)

    print("KERNEL_OK")
</pallas_src>

<mosaic_0001>
module attributes {stable_mosaic.version = 11 : i64} {
  func.func @conv1d_kernel(%arg0: memref<2x4x16xf32, #tpu.memory_space<vmem>>, %arg1: memref<80xf32, #tpu.memory_space<smem>>, %arg2: memref<4xf32, #tpu.memory_space<smem>>, %arg3: memref<2x4x16xf32, #tpu.memory_space<vmem>>, %arg4: memref<2x4x20xf32, #tpu.memory_space<vmem>>) attributes {dimension_semantics = [], scalar_prefetch = 0 : i64, scratch_operands = 1 : i64, tpu.core_type = #tpu.core_type<tc>} {
    %cst = arith.constant 0.000000e+00 : f32
    %0 = vector.broadcast %cst : f32 to vector<2x4x20xf32>
    %c0 = arith.constant 0 : index
    %c0_0 = arith.constant 0 : index
    %c0_1 = arith.constant 0 : index
    %1 = vector.load %arg4[%c0, %c0_0, %c0_1] : memref<2x4x20xf32, #tpu.memory_space<vmem>>, vector<2x4x20xf32>
    tpu.vector_store %arg4[%c0, %c0_0, %c0_1], %0 {strides = array<i32>} : memref<2x4x20xf32, #tpu.memory_space<vmem>>, vector<2x4x20xf32>,
    %c0_2 = arith.constant 0 : index
    %c0_3 = arith.constant 0 : index
    %c0_4 = arith.constant 0 : index
    %2 = vector.load %arg0[%c0_2, %c0_3, %c0_4] : memref<2x4x16xf32, #tpu.memory_space<vmem>>, vector<2x4x16xf32>
    %c0_5 = arith.constant 0 : index
    %c0_6 = arith.constant 0 : index
    %c2 = arith.constant 2 : index
    %3 = vector.load %arg4[%c0_5, %c0_6, %c2] : memref<2x4x20xf32, #tpu.memory_space<vmem>>, vector<2x4x16xf32>
    tpu.vector_store %arg4[%c0_5, %c0_6, %c2], %2 {strides = array<i32>} : memref<2x4x20xf32, #tpu.memory_space<vmem>>, vector<2x4x16xf32>,
    %c0_7 = arith.constant 0 : index
    %c0_8 = arith.constant 0 : index
    %c0_9 = arith.constant 0 : index
    %4 = vector.load %arg4[%c0_7, %c0_8, %c0_9] : memref<2x4x20xf32, #tpu.memory_space<vmem>>, vector<2x1x16xf32>
    %5 = vector.shape_cast %4 : vector<2x1x16xf32> to vector<2x16xf32>
    %c0_10 = arith.constant 0 : index
    %c0_11 = arith.constant 0 : index
    %c1 = arith.constant 1 : index
    %6 = vector.load %arg4[%c0_10, %c0_11, %c1] : memref<2x4x20xf32, #tpu.memory_space<vmem>>, vector<2x1x16xf32>
    %7 = vector.shape_cast %6 : vector<2x1x16xf32> to vector<2x16xf32>
    %c0_12 = arith.constant 0 : index
    %c0_13 = arith.constant 0 : index
    %c2_14 = arith.constant 2 : index
    %8 = vector.load %arg4[%c0_12, %c0_13, %c2_14] : memref<2x4x20xf32, #tpu.memory_space<vmem>>, vector<2x1x16xf32>
    %9 = vector.shape_cast %8 : vector<2x1x16xf32> to vector<2x16xf32>
    %c0_15 = arith.constant 0 : index
    %c0_16 = arith.constant 0 : index
    %c3 = arith.constant 3 : index
    %10 = vector.load %arg4[%c0_15, %c0_16, %c3] : memref<2x4x20xf32, #tpu.memory_space<vmem>>, vector<2x1x16xf32>
    %11 = vector.shape_cast %10 : vector<2x1x16xf32> to vector<2x16xf32>
    %c0_17 = arith.constant 0 : index
    %c0_18 = arith.constant 0 : index
    %c4 = arith.constant 4 : index
    %12 = vector.load %arg4[%c0_17, %c0_18, %c4] : memref<2x4x20xf32, #tpu.memory_space<vmem>>, vector<2x1x16xf32>
    %13 = vector.shape_cast %12 : vector<2x1x16xf32> to vector<2x16xf32>
    %c0_19 = arith.constant 0 : index
    %c1_20 = arith.constant 1 : index
    %c0_21 = arith.constant 0 : index
    %14 = vector.load %arg4[%c0_19, %c1_20, %c0_21] : memref<2x4x20xf32, #tpu.memory_space<vmem>>, vector<2x1x16xf32>
    %15 = vector.shape_cast %14 : vector<2x1x16xf32> to vector<2x16xf32>
    %c0_22 = arith.constant 0 : index
    %c1_23 = arith.constant 1 : index
    %c1_24 = arith.constant 1 : index
    %16 = vector.load %arg4[%c0_22, %c1_23, %c1_24] : memref<2x4x20xf32, #tpu.memory_space<vmem>>, vector<2x1x16xf32>
    %17 = vector.shape_cast %16 : vector<2x1x16xf32> to vector<2x16xf32>
    %c0_25 = arith.constant 0 : index
    %c1_26 = arith.constant 1 : index
    %c2_27 = arith.constant 2 : index
    %18 = vector.load %arg4[%c0_25, %c1_26, %c2_27] : memref<2x4x20xf32, #tpu.memory_space<vmem>>, vector<2x1x16xf32>
    %19 = vector.shape_cast %18 : vector<2x1x16xf32> to vector<2x16xf32>
    %c0_28 = arith.constant 0 : index
    %c1_29 = arith.constant 1 : index
    %c3_30 = arith.constant 3 : index
    %20 = vector.load %arg4[%c0_28, %c1_29, %c3_30] : memref<2x4x20xf32, #tpu.memory_space<vmem>>, vector<2x1x16xf32>
    %21 = vector.shape_cast %20 : vector<2x1x16xf32> to vector<2x16xf32>
    %c0_31 = arith.constant 0 : index
    %c1_32 = arith.constant 1 : index
    %c4_33 = arith.constant 4 : index
    %22 = vector.load %arg4[%c0_31, %c1_32, %c4_33] : memref<2x4x20xf32, #tpu.memory_space<vmem>>, vector<2x1x16xf32>
    %23 = vector.shape_cast %22 : vector<2x1x16xf32> to vector<2x16xf32>
    %c0_34 = arith.constant 0 : index
    %c2_35 = arith.constant 2 : index
    %c0_36 = arith.constant 0 : index
    %24 = vector.load %arg4[%c0_34, %c2_35, %c0_36] : memref<2x4x20xf32, #tpu.memory_space<vmem>>, vector<2x1x16xf32>
    %25 = vector.shape_cast %24 : vector<2x1x16xf32> to vector<2x16xf32>
    %c0_37 = arith.constant 0 : index
    %c2_38 = arith.constant 2 : index
    %c1_39 = arith.constant 1 : index
    %26 = vector.load %arg4[%c0_37, %c2_38, %c1_39] : memref<2x4x20xf32, #tpu.memory_space<vmem>>, vector<2x1x16xf32>
    %27 = vector.shape_cast %26 : vector<2x1x16xf32> to vector<2x16xf32>
    %c0_40 = arith.constant 0 : index
    %c2_41 = arith.constant 2 : index
    %c2_42 = arith.constant 2 : index
    %28 = vector.load %arg4[%c0_40, %c2_41, %c2_42] : memref<2x4x20xf32, #tpu.memory_space<vmem>>, vector<2x1x16xf32>
    %29 = vector.shape_cast %28 : vector<2x1x16xf32> to vector<2x16xf32>
    %c0_43 = arith.constant 0 : index
    %c2_44 = arith.constant 2 : index
    %c3_45 = arith.constant 3 : index
    %30 = vector.load %arg4[%c0_43, %c2_44, %c3_45] : memref<2x4x20xf32, #tpu.memory_space<vmem>>, vector<2x1x16xf32>
    %31 = vector.shape_cast %30 : vector<2x1x16xf32> to vector<2x16xf32>
    %c0_46 = arith.constant 0 : index
    %c2_47 = arith.constant 2 : index
    %c4_48 = arith.constant 4 : index
    %32 = vector.load %arg4[%c0_46, %c2_47, %c4_48] : memref<2x4x20xf32, #tpu.memory_space<vmem>>, vector<2x1x16xf32>
    %33 = vector.shape_cast %32 : vector<2x1x16xf32> to vector<2x16xf32>
    %c0_49 = arith.constant 0 : index
    %c3_50 = arith.constant 3 : index
    %c0_51 = arith.constant 0 : index
    %34 = vector.load %arg4[%c0_49, %c3_50, %c0_51] : memref<2x4x20xf32, #tpu.memory_space<vmem>>, vector<2x1x16xf32>
    %35 = vector.shape_cast %34 : vector<2x1x16xf32> to vector<2x16xf32>
    %c0_52 = arith.constant 0 : index
    %c3_53 = arith.constant 3 : index
    %c1_54 = arith.constant 1 : index
    %36 = vector.load %arg4[%c0_52, %c3_53, %c1_54] : memref<2x4x20xf32, #tpu.memory_space<vmem>>, vector<2x1x16xf32>
    %37 = vector.shape_cast %36 : vector<2x1x16xf32> to vector<2x16xf32>
    %c0_55 = arith.constant 0 : index
    %c3_56 = arith.constant 3 : index
    %c2_57 = arith.constant 2 : index
    %38 = vector.load %arg4[%c0_55, %c3_56, %c2_57] : memref<2x4x20xf32, #tpu.memory_space<vmem>>, vector<2x1x16xf32>
    %39 = vector.shape_cast %38 : vector<2x1x16xf32> to vector<2x16xf32>
    %c0_58 = arith.constant 0 : index
    %c3_59 = arith.constant 3 : index
    %c3_60 = arith.constant 3 : index
    %40 = vector.load %arg4[%c0_58, %c3_59, %c3_60] : memref<2x4x20xf32, #tpu.memory_space<vmem>>, vector<2x1x16xf32>
    %41 = vector.shape_cast %40 : vector<2x1x16xf32> to vector<2x16xf32>
    %c0_61 = arith.constant 0 : index
    %c3_62 = arith.constant 3 : index
    %c4_63 = arith.constant 4 : index
    %42 = vector.load %arg4[%c0_61, %c3_62, %c4_63] : memref<2x4x20xf32, #tpu.memory_space<vmem>>, vector<2x1x16xf32>
    %43 = vector.shape_cast %42 : vector<2x1x16xf32> to vector<2x16xf32>
    %c0_64 = arith.constant 0 : index
    %44 = memref.load %arg2[%c0_64] : memref<4xf32, #tpu.memory_space<smem>>
    %45 = vector.broadcast %44 : f32 to vector<2x16xf32>
    %c0_65 = arith.constant 0 : index
    %46 = memref.load %arg1[%c0_65] : memref<80xf32, #tpu.memory_space<smem>>
    %47 = vector.broadcast %46 : f32 to vector<2x16xf32>
    %48 = arith.mulf %47, %5 : vector<2x16xf32>
    %49 = arith.addf %45, %48 : vector<2x16xf32>
    %c1_66 = arith.constant 1 : index
    %50 = memref.load %arg1[%c1_66] : memref<80xf32, #tpu.memory_space<smem>>
    %51 = vector.broadcast %50 : f32 to vector<2x16xf32>
    %52 = arith.mulf %51, %7 : vector<2x16xf32>
    %53 = arith.addf %49, %52 : vector<2x16xf32>
    %c2_67 = arith.constant 2 : index
    %54 = memref.load %arg1[%c2_67] : memref<80xf32, #tpu.memory_space<smem>>
    %55 = vector.broadcast %54 : f32 to vector<2x16xf32>
    %56 = arith.mulf %55, %9 : vector<2x16xf32>
    %57 = arith.addf %53, %56 : vector<2x16xf32>
    %c3_68 = arith.constant 3 : index
    %58 = memref.load %arg1[%c3_68] : memref<80xf32, #tpu.memory_space<smem>>
    %59 = vector.broadcast %58 : f32 to vector<2x16xf32>
    %60 = arith.mulf %59, %11 : vector<2x16xf32>
    %61 = arith.addf %57, %60 : vector<2x16xf32>
    %c4_69 = arith.constant 4 : index
    %62 = memref.load %arg1[%c4_69] : memref<80xf32, #tpu.memory_space<smem>>
    %63 = vector.broadcast %62 : f32 to vector<2x16xf32>
    %64 = arith.mulf %63, %13 : vector<2x16xf32>
    %65 = arith.addf %61, %64 : vector<2x16xf32>
    %c5 = arith.constant 5 : index
    %66 = memref.load %arg1[%c5] : memref<80xf32, #tpu.memory_space<smem>>
    %67 = vector.broadcast %66 : f32 to vector<2x16xf32>
    %68 = arith.mulf %67, %15 : vector<2x16xf32>
    %69 = arith.addf %65, %68 : vector<2x16xf32>
    %c6 = arith.constant 6 : index
    %70 = memref.load %arg1[%c6] : memref<80xf32, #tpu.memory_space<smem>>
    %71 = vector.broadcast %70 : f32 to vector<2x16xf32>
    %72 = arith.mulf %71, %17 : vector<2x16xf32>
    %73 = arith.addf %69, %72 : vector<2x16xf32>
    %c7 = arith.constant 7 : index
    %74 = memref.load %arg1[%c7] : memref<80xf32, #tpu.memory_space<smem>>
    %75 = vector.broadcast %74 : f32 to vector<2x16xf32>
    %76 = arith.mulf %75, %19 : vector<2x16xf32>
    %77 = arith.addf %73, %76 : vector<2x16xf32>
    %c8 = arith.constant 8 : index
    %78 = memref.load %arg1[%c8] : memref<80xf32, #tpu.memory_space<smem>>
    %79 = vector.broadcast %78 : f32 to vector<2x16xf32>
    %80 = arith.mulf %79, %21 : vector<2x16xf32>
    %81 = arith.addf %77, %80 : vector<2x16xf32>
    %c9 = arith.constant 9 : index
    %82 = memref.load %arg1[%c9] : memref<80xf32, #tpu.memory_space<smem>>
    %83 = vector.broadcast %82 : f32 to vector<2x16xf32>
    %84 = arith.mulf %83, %23 : vector<2x16xf32>
    %85 = arith.addf %81, %84 : vector<2x16xf32>
    %c10 = arith.constant 10 : index
    %86 = memref.load %arg1[%c10] : memref<80xf32, #tpu.memory_space<smem>>
    %87 = vector.broadcast %86 : f32 to vector<2x16xf32>
    %88 = arith.mulf %87, %25 : vector<2x16xf32>
    %89 = arith.addf %85, %88 : vector<2x16xf32>
    %c11 = arith.constant 11 : index
    %90 = memref.load %arg1[%c11] : memref<80xf32, #tpu.memory_space<smem>>
    %91 = vector.broadcast %90 : f32 to vector<2x16xf32>
    %92 = arith.mulf %91, %27 : vector<2x16xf32>
    %93 = arith.addf %89, %92 : vector<2x16xf32>
    %c12 = arith.constant 12 : index
    %94 = memref.load %arg1[%c12] : memref<80xf32, #tpu.memory_space<smem>>
    %95 = vector.broadcast %94 : f32 to vector<2x16xf32>
    %96 = arith.mulf %95, %29 : vector<2x16xf32>
    %97 = arith.addf %93, %96 : vector<2x16xf32>
    %c13 = arith.constant 13 : index
    %98 = memref.load %arg1[%c13] : memref<80xf32, #tpu.memory_space<smem>>
    %99 = vector.broadcast %98 : f32 to vector<2x16xf32>
    %100 = arith.mulf %99, %31 : vector<2x16xf32>
    %101 = arith.addf %97, %100 : vector<2x16xf32>
    %c14 = arith.constant 14 : index
    %102 = memref.load %arg1[%c14] : memref<80xf32, #tpu.memory_space<smem>>
    %103 = vector.broadcast %102 : f32 to vector<2x16xf32>
    %104 = arith.mulf %103, %33 : vector<2x16xf32>
    %105 = arith.addf %101, %104 : vector<2x16xf32>
    %c15 = arith.constant 15 : index
    %106 = memref.load %arg1[%c15] : memref<80xf32, #tpu.memory_space<smem>>
    %107 = vector.broadcast %106 : f32 to vector<2x16xf32>
    %108 = arith.mulf %107, %35 : vector<2x16xf32>
    %109 = arith.addf %105, %108 : vector<2x16xf32>
    %c16 = arith.constant 16 : index
    %110 = memref.load %arg1[%c16] : memref<80xf32, #tpu.memory_space<smem>>
    %111 = vector.broadcast %110 : f32 to vector<2x16xf32>
    %112 = arith.mulf %111, %37 : vector<2x16xf32>
    %113 = arith.addf %109, %112 : vector<2x16xf32>
    %c17 = arith.constant 17 : index
    %114 = memref.load %arg1[%c17] : memref<80xf32, #tpu.memory_space<smem>>
    %115 = vector.broadcast %114 : f32 to vector<2x16xf32>
    %116 = arith.mulf %115, %39 : vector<2x16xf32>
    %117 = arith.addf %113, %116 : vector<2x16xf32>
    %c18 = arith.constant 18 : index
    %118 = memref.load %arg1[%c18] : memref<80xf32, #tpu.memory_space<smem>>
    %119 = vector.broadcast %118 : f32 to vector<2x16xf32>
    %120 = arith.mulf %119, %41 : vector<2x16xf32>
    %121 = arith.addf %117, %120 : vector<2x16xf32>
    %c19 = arith.constant 19 : index
    %122 = memref.load %arg1[%c19] : memref<80xf32, #tpu.memory_space<smem>>
    %123 = vector.broadcast %122 : f32 to vector<2x16xf32>
    %124 = arith.mulf %123, %43 : vector<2x16xf32>
    %125 = arith.addf %121, %124 : vector<2x16xf32>
    %c0_70 = arith.constant 0 : index
    %c0_71 = arith.constant 0 : index
    %c0_72 = arith.constant 0 : index
    %126 = vector.load %arg3[%c0_70, %c0_71, %c0_72] : memref<2x4x16xf32, #tpu.memory_space<vmem>>, vector<2x1x16xf32>
    %127 = vector.shape_cast %126 : vector<2x1x16xf32> to vector<2x16xf32>
    %128 = vector.shape_cast %125 : vector<2x16xf32> to vector<2x1x16xf32>
    tpu.vector_store %arg3[%c0_70, %c0_71, %c0_72], %128 {strides = array<i32>} : memref<2x4x16xf32, #tpu.memory_space<vmem>>, vector<2x1x16xf32>,
    %c1_73 = arith.constant 1 : index
    %129 = memref.load %arg2[%c1_73] : memref<4xf32, #tpu.memory_space<smem>>
    %130 = vector.broadcast %129 : f32 to vector<2x16xf32>
    %c20 = arith.constant 20 : index
    %131 = memref.load %arg1[%c20] : memref<80xf32, #tpu.memory_space<smem>>
    %132 = vector.broadcast %131 : f32 to vector<2x16xf32>
    %133 = arith.mulf %132, %5 : vector<2x16xf32>
    %134 = arith.addf %130, %133 : vector<2x16xf32>
    %c21 = arith.constant 21 : index
    %135 = memref.load %arg1[%c21] : memref<80xf32, #tpu.memory_space<smem>>
    %136 = vector.broadcast %135 : f32 to vector<2x16xf32>
    %137 = arith.mulf %136, %7 : vector<2x16xf32>
    %138 = arith.addf %134, %137 : vector<2x16xf32>
    %c22 = arith.constant 22 : index
    %139 = memref.load %arg1[%c22] : memref<80xf32, #tpu.memory_space<smem>>
    %140 = vector.broadcast %139 : f32 to vector<2x16xf32>
    %141 = arith.mulf %140, %9 : vector<2x16xf32>
    %142 = arith.addf %138, %141 : vector<2x16xf32>
    %c23 = arith.constant 23 : index
    %143 = memref.load %arg1[%c23] : memref<80xf32, #tpu.memory_space<smem>>
    %144 = vector.broadcast %143 : f32 to vector<2x16xf32>
    %145 = arith.mulf %144, %11 : vector<2x16xf32>
    %146 = arith.addf %142, %145 : vector<2x16xf32>
    %c24 = arith.constant 24 : index
    %147 = memref.load %arg1[%c24] : memref<80xf32, #tpu.memory_space<smem>>
    %148 = vector.broadcast %147 : f32 to vector<2x16xf32>
    %149 = arith.mulf %148, %13 : vector<2x16xf32>
    %150 = arith.addf %146, %149 : vector<2x16xf32>
    %c25 = arith.constant 25 : index
    %151 = memref.load %arg1[%c25] : memref<80xf32, #tpu.memory_space<smem>>
    %152 = vector.broadcast %151 : f32 to vector<2x16xf32>
    %153 = arith.mulf %152, %15 : vector<2x16xf32>
    %154 = arith.addf %150, %153 : vector<2x16xf32>
    %c26 = arith.constant 26 : index
    %155 = memref.load %arg1[%c26] : memref<80xf32, #tpu.memory_space<smem>>
    %156 = vector.broadcast %155 : f32 to vector<2x16xf32>
    %157 = arith.mulf %156, %17 : vector<2x16xf32>
    %158 = arith.addf %154, %157 : vector<2x16xf32>
    %c27 = arith.constant 27 : index
    %159 = memref.load %arg1[%c27] : memref<80xf32, #tpu.memory_space<smem>>
    %160 = vector.broadcast %159 : f32 to vector<2x16xf32>
    %161 = arith.mulf %160, %19 : vector<2x16xf32>
    %162 = arith.addf %158, %161 : vector<2x16xf32>
    %c28 = arith.constant 28 : index
    %163 = memref.load %arg1[%c28] : memref<80xf32, #tpu.memory_space<smem>>
    %164 = vector.broadcast %163 : f32 to vector<2x16xf32>
    %165 = arith.mulf %164, %21 : vector<2x16xf32>
    %166 = arith.addf %162, %165 : vector<2x16xf32>
    %c29 = arith.constant 29 : index
    %167 = memref.load %arg1[%c29] : memref<80xf32, #tpu.memory_space<smem>>
    %168 = vector.broadcast %167 : f32 to vector<2x16xf32>
    %169 = arith.mulf %168, %23 : vector<2x16xf32>
    %170 = arith.addf %166, %169 : vector<2x16xf32>
    %c30 = arith.constant 30 : index
    %171 = memref.load %arg1[%c30] : memref<80xf32, #tpu.memory_space<smem>>
    %172 = vector.broadcast %171 : f32 to vector<2x16xf32>
    %173 = arith.mulf %172, %25 : vector<2x16xf32>
    %174 = arith.addf %170, %173 : vector<2x16xf32>
    %c31 = arith.constant 31 : index
    %175 = memref.load %arg1[%c31] : memref<80xf32, #tpu.memory_space<smem>>
    %176 = vector.broadcast %175 : f32 to vector<2x16xf32>
    %177 = arith.mulf %176, %27 : vector<2x16xf32>
    %178 = arith.addf %174, %177 : vector<2x16xf32>
    %c32 = arith.constant 32 : index
    %179 = memref.load %arg1[%c32] : memref<80xf32, #tpu.memory_space<smem>>
    %180 = vector.broadcast %179 : f32 to vector<2x16xf32>
    %181 = arith.mulf %180, %29 : vector<2x16xf32>
    %182 = arith.addf %178, %181 : vector<2x16xf32>
    %c33 = arith.constant 33 : index
    %183 = memref.load %arg1[%c33] : memref<80xf32, #tpu.memory_space<smem>>
    %184 = vector.broadcast %183 : f32 to vector<2x16xf32>
    %185 = arith.mulf %184, %31 : vector<2x16xf32>
    %186 = arith.addf %182, %185 : vector<2x16xf32>
    %c34 = arith.constant 34 : index
    %187 = memref.load %arg1[%c34] : memref<80xf32, #tpu.memory_space<smem>>
    %188 = vector.broadcast %187 : f32 to vector<2x16xf32>
    %189 = arith.mulf %188, %33 : vector<2x16xf32>
    %190 = arith.addf %186, %189 : vector<2x16xf32>
    %c35 = arith.constant 35 : index
    %191 = memref.load %arg1[%c35] : memref<80xf32, #tpu.memory_space<smem>>
    %192 = vector.broadcast %191 : f32 to vector<2x16xf32>
    %193 = arith.mulf %192, %35 : vector<2x16xf32>
    %194 = arith.addf %190, %193 : vector<2x16xf32>
    %c36 = arith.constant 36 : index
    %195 = memref.load %arg1[%c36] : memref<80xf32, #tpu.memory_space<smem>>
    %196 = vector.broadcast %195 : f32 to vector<2x16xf32>
    %197 = arith.mulf %196, %37 : vector<2x16xf32>
    %198 = arith.addf %194, %197 : vector<2x16xf32>
    %c37 = arith.constant 37 : index
    %199 = memref.load %arg1[%c37] : memref<80xf32, #tpu.memory_space<smem>>
    %200 = vector.broadcast %199 : f32 to vector<2x16xf32>
    %201 = arith.mulf %200, %39 : vector<2x16xf32>
    %202 = arith.addf %198, %201 : vector<2x16xf32>
    %c38 = arith.constant 38 : index
    %203 = memref.load %arg1[%c38] : memref<80xf32, #tpu.memory_space<smem>>
    %204 = vector.broadcast %203 : f32 to vector<2x16xf32>
    %205 = arith.mulf %204, %41 : vector<2x16xf32>
    %206 = arith.addf %202, %205 : vector<2x16xf32>
    %c39 = arith.constant 39 : index
    %207 = memref.load %arg1[%c39] : memref<80xf32, #tpu.memory_space<smem>>
    %208 = vector.broadcast %207 : f32 to vector<2x16xf32>
    %209 = arith.mulf %208, %43 : vector<2x16xf32>
    %210 = arith.addf %206, %209 : vector<2x16xf32>
    %c0_74 = arith.constant 0 : index
    %c1_75 = arith.constant 1 : index
    %c0_76 = arith.constant 0 : index
    %211 = vector.load %arg3[%c0_74, %c1_75, %c0_76] : memref<2x4x16xf32, #tpu.memory_space<vmem>>, vector<2x1x16xf32>
    %212 = vector.shape_cast %211 : vector<2x1x16xf32> to vector<2x16xf32>
    %213 = vector.shape_cast %210 : vector<2x16xf32> to vector<2x1x16xf32>
    tpu.vector_store %arg3[%c0_74, %c1_75, %c0_76], %213 {strides = array<i32>} : memref<2x4x16xf32, #tpu.memory_space<vmem>>, vector<2x1x16xf32>,
    %c2_77 = arith.constant 2 : index
    %214 = memref.load %arg2[%c2_77] : memref<4xf32, #tpu.memory_space<smem>>
    %215 = vector.broadcast %214 : f32 to vector<2x16xf32>
    %c40 = arith.constant 40 : index
    %216 = memref.load %arg1[%c40] : memref<80xf32, #tpu.memory_space<smem>>
    %217 = vector.broadcast %216 : f32 to vector<2x16xf32>
    %218 = arith.mulf %217, %5 : vector<2x16xf32>
    %219 = arith.addf %215, %218 : vector<2x16xf32>
    %c41 = arith.constant 41 : index
    %220 = memref.load %arg1[%c41] : memref<80xf32, #tpu.memory_space<smem>>
    %221 = vector.broadcast %220 : f32 to vector<2x16xf32>
    %222 = arith.mulf %221, %7 : vector<2x16xf32>
    %223 = arith.addf %219, %222 : vector<2x16xf32>
    %c42 = arith.constant 42 : index
    %224 = memref.load %arg1[%c42] : memref<80xf32, #tpu.memory_space<smem>>
    %225 = vector.broadcast %224 : f32 to vector<2x16xf32>
    %226 = arith.mulf %225, %9 : vector<2x16xf32>
    %227 = arith.addf %223, %226 : vector<2x16xf32>
    %c43 = arith.constant 43 : index
    %228 = memref.load %arg1[%c43] : memref<80xf32, #tpu.memory_space<smem>>
    %229 = vector.broadcast %228 : f32 to vector<2x16xf32>
    %230 = arith.mulf %229, %11 : vector<2x16xf32>
    %231 = arith.addf %227, %230 : vector<2x16xf32>
    %c44 = arith.constant 44 : index
    %232 = memref.load %arg1[%c44] : memref<80xf32, #tpu.memory_space<smem>>
    %233 = vector.broadcast %232 : f32 to vector<2x16xf32>
    %234 = arith.mulf %233, %13 : vector<2x16xf32>
    %235 = arith.addf %231, %234 : vector<2x16xf32>
    %c45 = arith.constant 45 : index
    %236 = memref.load %arg1[%c45] : memref<80xf32, #tpu.memory_space<smem>>
    %237 = vector.broadcast %236 : f32 to vector<2x16xf32>
    %238 = arith.mulf %237, %15 : vector<2x16xf32>
    %239 = arith.addf %235, %238 : vector<2x16xf32>
    %c46 = arith.constant 46 : index
    %240 = memref.load %arg1[%c46] : memref<80xf32, #tpu.memory_space<smem>>
    %241 = vector.broadcast %240 : f32 to vector<2x16xf32>
    %242 = arith.mulf %241, %17 : vector<2x16xf32>
    %243 = arith.addf %239, %242 : vector<2x16xf32>
    %c47 = arith.constant 47 : index
    %244 = memref.load %arg1[%c47] : memref<80xf32, #tpu.memory_space<smem>>
    %245 = vector.broadcast %244 : f32 to vector<2x16xf32>
    %246 = arith.mulf %245, %19 : vector<2x16xf32>
    %247 = arith.addf %243, %246 : vector<2x16xf32>
    %c48 = arith.constant 48 : index
    %248 = memref.load %arg1[%c48] : memref<80xf32, #tpu.memory_space<smem>>
    %249 = vector.broadcast %248 : f32 to vector<2x16xf32>
    %250 = arith.mulf %249, %21 : vector<2x16xf32>
    %251 = arith.addf %247, %250 : vector<2x16xf32>
    %c49 = arith.constant 49 : index
    %252 = memref.load %arg1[%c49] : memref<80xf32, #tpu.memory_space<smem>>
    %253 = vector.broadcast %252 : f32 to vector<2x16xf32>
    %254 = arith.mulf %253, %23 : vector<2x16xf32>
    %255 = arith.addf %251, %254 : vector<2x16xf32>
    %c50 = arith.constant 50 : index
    %256 = memref.load %arg1[%c50] : memref<80xf32, #tpu.memory_space<smem>>
    %257 = vector.broadcast %256 : f32 to vector<2x16xf32>
    %258 = arith.mulf %257, %25 : vector<2x16xf32>
    %259 = arith.addf %255, %258 : vector<2x16xf32>
    %c51 = arith.constant 51 : index
    %260 = memref.load %arg1[%c51] : memref<80xf32, #tpu.memory_space<smem>>
    %261 = vector.broadcast %260 : f32 to vector<2x16xf32>
    %262 = arith.mulf %261, %27 : vector<2x16xf32>
    %263 = arith.addf %259, %262 : vector<2x16xf32>
    %c52 = arith.constant 52 : index
    %264 = memref.load %arg1[%c52] : memref<80xf32, #tpu.memory_space<smem>>
    %265 = vector.broadcast %264 : f32 to vector<2x16xf32>
    %266 = arith.mulf %265, %29 : vector<2x16xf32>
    %267 = arith.addf %263, %266 : vector<2x16xf32>
    %c53 = arith.constant 53 : index
    %268 = memref.load %arg1[%c53] : memref<80xf32, #tpu.memory_space<smem>>
    %269 = vector.broadcast %268 : f32 to vector<2x16xf32>
    %270 = arith.mulf %269, %31 : vector<2x16xf32>
    %271 = arith.addf %267, %270 : vector<2x16xf32>
    %c54 = arith.constant 54 : index
    %272 = memref.load %arg1[%c54] : memref<80xf32, #tpu.memory_space<smem>>
    %273 = vector.broadcast %272 : f32 to vector<2x16xf32>
    %274 = arith.mulf %273, %33 : vector<2x16xf32>
    %275 = arith.addf %271, %274 : vector<2x16xf32>
    %c55 = arith.constant 55 : index
    %276 = memref.load %arg1[%c55] : memref<80xf32, #tpu.memory_space<smem>>
    %277 = vector.broadcast %276 : f32 to vector<2x16xf32>
    %278 = arith.mulf %277, %35 : vector<2x16xf32>
    %279 = arith.addf %275, %278 : vector<2x16xf32>
    %c56 = arith.constant 56 : index
    %280 = memref.load %arg1[%c56] : memref<80xf32, #tpu.memory_space<smem>>
    %281 = vector.broadcast %280 : f32 to vector<2x16xf32>
    %282 = arith.mulf %281, %37 : vector<2x16xf32>
    %283 = arith.addf %279, %282 : vector<2x16xf32>
    %c57 = arith.constant 57 : index
    %284 = memref.load %arg1[%c57] : memref<80xf32, #tpu.memory_space<smem>>
    %285 = vector.broadcast %284 : f32 to vector<2x16xf32>
    %286 = arith.mulf %285, %39 : vector<2x16xf32>
    %287 = arith.addf %283, %286 : vector<2x16xf32>
    %c58 = arith.constant 58 : index
    %288 = memref.load %arg1[%c58] : memref<80xf32, #tpu.memory_space<smem>>
    %289 = vector.broadcast %288 : f32 to vector<2x16xf32>
    %290 = arith.mulf %289, %41 : vector<2x16xf32>
    %291 = arith.addf %287, %290 : vector<2x16xf32>
    %c59 = arith.constant 59 : index
    %292 = memref.load %arg1[%c59] : memref<80xf32, #tpu.memory_space<smem>>
    %293 = vector.broadcast %292 : f32 to vector<2x16xf32>
    %294 = arith.mulf %293, %43 : vector<2x16xf32>
    %295 = arith.addf %291, %294 : vector<2x16xf32>
    %c0_78 = arith.constant 0 : index
    %c2_79 = arith.constant 2 : index
    %c0_80 = arith.constant 0 : index
    %296 = vector.load %arg3[%c0_78, %c2_79, %c0_80] : memref<2x4x16xf32, #tpu.memory_space<vmem>>, vector<2x1x16xf32>
    %297 = vector.shape_cast %296 : vector<2x1x16xf32> to vector<2x16xf32>
    %298 = vector.shape_cast %295 : vector<2x16xf32> to vector<2x1x16xf32>
    tpu.vector_store %arg3[%c0_78, %c2_79, %c0_80], %298 {strides = array<i32>} : memref<2x4x16xf32, #tpu.memory_space<vmem>>, vector<2x1x16xf32>,
    %c3_81 = arith.constant 3 : index
    %299 = memref.load %arg2[%c3_81] : memref<4xf32, #tpu.memory_space<smem>>
    %300 = vector.broadcast %299 : f32 to vector<2x16xf32>
    %c60 = arith.constant 60 : index
    %301 = memref.load %arg1[%c60] : memref<80xf32, #tpu.memory_space<smem>>
    %302 = vector.broadcast %301 : f32 to vector<2x16xf32>
    %303 = arith.mulf %302, %5 : vector<2x16xf32>
    %304 = arith.addf %300, %303 : vector<2x16xf32>
    %c61 = arith.constant 61 : index
    %305 = memref.load %arg1[%c61] : memref<80xf32, #tpu.memory_space<smem>>
    %306 = vector.broadcast %305 : f32 to vector<2x16xf32>
    %307 = arith.mulf %306, %7 : vector<2x16xf32>
    %308 = arith.addf %304, %307 : vector<2x16xf32>
    %c62 = arith.constant 62 : index
    %309 = memref.load %arg1[%c62] : memref<80xf32, #tpu.memory_space<smem>>
    %310 = vector.broadcast %309 : f32 to vector<2x16xf32>
    %311 = arith.mulf %310, %9 : vector<2x16xf32>
    %312 = arith.addf %308, %311 : vector<2x16xf32>
    %c63 = arith.constant 63 : index
    %313 = memref.load %arg1[%c63] : memref<80xf32, #tpu.memory_space<smem>>
    %314 = vector.broadcast %313 : f32 to vector<2x16xf32>
    %315 = arith.mulf %314, %11 : vector<2x16xf32>
    %316 = arith.addf %312, %315 : vector<2x16xf32>
    %c64 = arith.constant 64 : index
    %317 = memref.load %arg1[%c64] : memref<80xf32, #tpu.memory_space<smem>>
    %318 = vector.broadcast %317 : f32 to vector<2x16xf32>
    %319 = arith.mulf %318, %13 : vector<2x16xf32>
    %320 = arith.addf %316, %319 : vector<2x16xf32>
    %c65 = arith.constant 65 : index
    %321 = memref.load %arg1[%c65] : memref<80xf32, #tpu.memory_space<smem>>
    %322 = vector.broadcast %321 : f32 to vector<2x16xf32>
    %323 = arith.mulf %322, %15 : vector<2x16xf32>
    %324 = arith.addf %320, %323 : vector<2x16xf32>
    %c66 = arith.constant 66 : index
    %325 = memref.load %arg1[%c66] : memref<80xf32, #tpu.memory_space<smem>>
    %326 = vector.broadcast %325 : f32 to vector<2x16xf32>
    %327 = arith.mulf %326, %17 : vector<2x16xf32>
    %328 = arith.addf %324, %327 : vector<2x16xf32>
    %c67 = arith.constant 67 : index
    %329 = memref.load %arg1[%c67] : memref<80xf32, #tpu.memory_space<smem>>
    %330 = vector.broadcast %329 : f32 to vector<2x16xf32>
    %331 = arith.mulf %330, %19 : vector<2x16xf32>
    %332 = arith.addf %328, %331 : vector<2x16xf32>
    %c68 = arith.constant 68 : index
    %333 = memref.load %arg1[%c68] : memref<80xf32, #tpu.memory_space<smem>>
    %334 = vector.broadcast %333 : f32 to vector<2x16xf32>
    %335 = arith.mulf %334, %21 : vector<2x16xf32>
    %336 = arith.addf %332, %335 : vector<2x16xf32>
    %c69 = arith.constant 69 : index
    %337 = memref.load %arg1[%c69] : memref<80xf32, #tpu.memory_space<smem>>
    %338 = vector.broadcast %337 : f32 to vector<2x16xf32>
    %339 = arith.mulf %338, %23 : vector<2x16xf32>
    %340 = arith.addf %336, %339 : vector<2x16xf32>
    %c70 = arith.constant 70 : index
    %341 = memref.load %arg1[%c70] : memref<80xf32, #tpu.memory_space<smem>>
    %342 = vector.broadcast %341 : f32 to vector<2x16xf32>
    %343 = arith.mulf %342, %25 : vector<2x16xf32>
    %344 = arith.addf %340, %343 : vector<2x16xf32>
    %c71 = arith.constant 71 : index
    %345 = memref.load %arg1[%c71] : memref<80xf32, #tpu.memory_space<smem>>
    %346 = vector.broadcast %345 : f32 to vector<2x16xf32>
    %347 = arith.mulf %346, %27 : vector<2x16xf32>
    %348 = arith.addf %344, %347 : vector<2x16xf32>
    %c72 = arith.constant 72 : index
    %349 = memref.load %arg1[%c72] : memref<80xf32, #tpu.memory_space<smem>>
    %350 = vector.broadcast %349 : f32 to vector<2x16xf32>
    %351 = arith.mulf %350, %29 : vector<2x16xf32>
    %352 = arith.addf %348, %351 : vector<2x16xf32>
    %c73 = arith.constant 73 : index
    %353 = memref.load %arg1[%c73] : memref<80xf32, #tpu.memory_space<smem>>
    %354 = vector.broadcast %353 : f32 to vector<2x16xf32>
    %355 = arith.mulf %354, %31 : vector<2x16xf32>
    %356 = arith.addf %352, %355 : vector<2x16xf32>
    %c74 = arith.constant 74 : index
    %357 = memref.load %arg1[%c74] : memref<80xf32, #tpu.memory_space<smem>>
    %358 = vector.broadcast %357 : f32 to vector<2x16xf32>
    %359 = arith.mulf %358, %33 : vector<2x16xf32>
    %360 = arith.addf %356, %359 : vector<2x16xf32>
    %c75 = arith.constant 75 : index
    %361 = memref.load %arg1[%c75] : memref<80xf32, #tpu.memory_space<smem>>
    %362 = vector.broadcast %361 : f32 to vector<2x16xf32>
    %363 = arith.mulf %362, %35 : vector<2x16xf32>
    %364 = arith.addf %360, %363 : vector<2x16xf32>
    %c76 = arith.constant 76 : index
    %365 = memref.load %arg1[%c76] : memref<80xf32, #tpu.memory_space<smem>>
    %366 = vector.broadcast %365 : f32 to vector<2x16xf32>
    %367 = arith.mulf %366, %37 : vector<2x16xf32>
    %368 = arith.addf %364, %367 : vector<2x16xf32>
    %c77 = arith.constant 77 : index
    %369 = memref.load %arg1[%c77] : memref<80xf32, #tpu.memory_space<smem>>
    %370 = vector.broadcast %369 : f32 to vector<2x16xf32>
    %371 = arith.mulf %370, %39 : vector<2x16xf32>
    %372 = arith.addf %368, %371 : vector<2x16xf32>
    %c78 = arith.constant 78 : index
    %373 = memref.load %arg1[%c78] : memref<80xf32, #tpu.memory_space<smem>>
    %374 = vector.broadcast %373 : f32 to vector<2x16xf32>
    %375 = arith.mulf %374, %41 : vector<2x16xf32>
    %376 = arith.addf %372, %375 : vector<2x16xf32>
    %c79 = arith.constant 79 : index
    %377 = memref.load %arg1[%c79] : memref<80xf32, #tpu.memory_space<smem>>
    %378 = vector.broadcast %377 : f32 to vector<2x16xf32>
    %379 = arith.mulf %378, %43 : vector<2x16xf32>
    %380 = arith.addf %376, %379 : vector<2x16xf32>
    %c0_82 = arith.constant 0 : index
    %c3_83 = arith.constant 3 : index
    %c0_84 = arith.constant 0 : index
    %381 = vector.load %arg3[%c0_82, %c3_83, %c0_84] : memref<2x4x16xf32, #tpu.memory_space<vmem>>, vector<2x1x16xf32>
    %382 = vector.shape_cast %381 : vector<2x1x16xf32> to vector<2x16xf32>
    %383 = vector.shape_cast %380 : vector<2x16xf32> to vector<2x1x16xf32>
    tpu.vector_store %arg3[%c0_82, %c3_83, %c0_84], %383 {strides = array<i32>} : memref<2x4x16xf32, #tpu.memory_space<vmem>>, vector<2x1x16xf32>,
    return
  }
}

</mosaic_0001>

<llo_original>
// kernel: tpu_custom_call.1
$region0: #{tpu_custom_call.1}
  #allocation0 [shape = 'u32[]', space=smem, size = 0x4, offset = 0x4, fixed_abs, tag = 'smem constant byte address 0x4 - core index']
  #allocation1 [shape = 'u32[144,128]{1,0:T(1,128)}', space=vmem, size = 0x12000, scoped, tag = 'internal scratch']
  #allocation2 [shape = 'f32[2,4,20]{2,1,0:T(4,128)}', space=vmem, size = 0x1000, scoped, tag = 'scratch operand']
  %s0 = inlined_call_operand.hbm [shape: f32[2,4,16], index: 0, kind: input, shape index: {}]
  %s1 = inlined_call_operand.vmem [shape: f32[80], index: 1, kind: input, shape index: {}]
  %s2 = inlined_call_operand.vmem [shape: f32[4], index: 2, kind: input, shape index: {}]
  %s3 = inlined_call_operand.hbm [shape: f32[2,4,16], index: 3, kind: output, shape index: {}]
  %s4 = sld [smem:[#allocation0]]
  $region34: #{tpu_custom_call.1} parent=0
    _
  %s6 = ssub.s32 1, %s4
  %s7 = scalar_select 0, %s6, %s4
  $region1: #{tpu_custom_call.1} parent=0
    #allocation3 [shape = 'u8[4096]{0}', space=vmem, size = 0x1000, scoped, tag = 'input window, operand 0, single buffered']
    #allocation4 [shape = 's32[1]{0}', space=sflag, size = 0x4, scoped, tag = 'scoped memory for tpu_custom_call.1']
    #allocation5 [shape = 's32[1]{0}', space=sflag, size = 0x4, scoped, tag = 'scoped memory for tpu_custom_call.1']
    #allocation6 [shape = 's32[1]{0}', space=sflag, size = 0x4, scoped, tag = 'scoped memory for tpu_custom_call.1']
    #allocation7 [shape = 'u8[512]{0}', space=smem, size = 0x200, scoped, tag = 'input window, operand 1, single buffered']
    #allocation8 [shape = 'u8[512]{0}', space=smem, size = 0x200, scoped, tag = 'input window, operand 2, single buffered']
    #allocation9 [shape = 's32[1]{0}', space=sflag, size = 0x4, scoped, tag = 'scoped memory for tpu_custom_call.1']
    #allocation10 [shape = 'u8[4096]{0}', space=vmem, size = 0x1000, scoped, tag = 'output window, operand 0, single buffered']
    %8 = vsyncpa [#allocation4], 0
    %9 = vsyncpa [#allocation6], 0
    %10 = vsyncpa [#allocation9], 0
    %11 = vsyncpa [#allocation5], 0
    // Predicated region
    $region2: #{tpu_custom_call.1} parent=1 // pred_check
      _
    $region3: #{tpu_custom_call.1} parent=1 // pred_check_branch
      %13 = sbr.rel (0) target = $region5
    $region4: #{tpu_custom_call.1} parent=1 // pred_region
      %s15 = ssub.s32 128, 128
      %16 = vsyncadd [#allocation4], %s15
      %s17 = sshll.u32 [#allocation3], 4
      %s18 = int_to_ptr.vmem [resolvable:$true] %s17
      %23 = dma.hbm_to_vmem [thread:$0]  %s0, 128, %s18, [#allocation4], 64, 64, 4
    $region5: #{tpu_custom_call.1} parent=1 // pred_fallthru
      _
    // Predicated region
    $region6: #{tpu_custom_call.1} parent=1 // pred_check
      _
    $region7: #{tpu_custom_call.1} parent=1 // pred_check_branch
      %25 = sbr.rel (0) target = $region9
    $region8: #{tpu_custom_call.1} parent=1 // pred_region
      %s27 = ssub.s32 16, 16
      %28 = vsyncadd [#allocation6], %s27
      %s30 = sshll.u32 %s1, 4
      %s31 = int_to_ptr.vmem [resolvable:$true] %s30
      %33 = dma.vmem_to_smem %s31, 16, [#allocation7], [#allocation6]
    $region9: #{tpu_custom_call.1} parent=1 // pred_fallthru
      _
    // Predicated region
    $region10: #{tpu_custom_call.1} parent=1 // pred_check
      _
    $region11: #{tpu_custom_call.1} parent=1 // pred_check_branch
      %35 = sbr.rel (0) target = $region13
    $region12: #{tpu_custom_call.1} parent=1 // pred_region
      %s37 = ssub.s32 16, 16
      %38 = vsyncadd [#allocation9], %s37
      %s40 = sshll.u32 %s2, 4
      %s41 = int_to_ptr.vmem [resolvable:$true] %s40
      %43 = dma.vmem_to_smem %s41, 16, [#allocation8], [#allocation9]
    $region13: #{tpu_custom_call.1} parent=1 // pred_fallthru
      _
    // Predicated region
    $region14: #{tpu_custom_call.1} parent=1 // pred_check
      _
    $region15: #{tpu_custom_call.1} parent=1 // pred_check_branch
      %45 = sbr.rel (0) target = $region17
    $region16: #{tpu_custom_call.1} parent=1 // pred_region
      %46 = dma.done [#allocation4], 128
    $region17: #{tpu_custom_call.1} parent=1 // pred_fallthru
      _
    // Predicated region
    $region18: #{tpu_custom_call.1} parent=1 // pred_check
      _
    $region19: #{tpu_custom_call.1} parent=1 // pred_check_branch
      %48 = sbr.rel (0) target = $region21
    $region20: #{tpu_custom_call.1} parent=1 // pred_region
      %49 = dma.done [#allocation6], 16
    $region21: #{tpu_custom_call.1} parent=1 // pred_fallthru
      _
    // Predicated region
    $region22: #{tpu_custom_call.1} parent=1 // pred_check
      _
    $region23: #{tpu_custom_call.1} parent=1 // pred_check_branch
      %51 = sbr.rel (0) target = $region25
    $region24: #{tpu_custom_call.1} parent=1 // pred_region
      %52 = dma.done [#allocation9], 16
    $region25: #{tpu_custom_call.1} parent=1 // pred_fallthru
      _
    %53 = sfence
    %vm54 = vcmask 158720
    %55 = vst.msk [vmem:[#allocation2] sm:$0xf] %vm54, 0.0
    %56 = vst.msk [vmem:[#allocation2 + $0x4] sm:$0xf] %vm54, 0.0
    %v57 = vld [vmem:[#allocation3] sm:$0xf]
    %v58 = vld [vmem:[#allocation3 + $0x4] sm:$0xf]
    %61 = vrot.lane.b32.xlu0 %v57, 2
    %v62 = vpop.permute.xlu0 %61
    %63 = vrot.lane.b32.xlu0 %v58, 2
    %v64 = vpop.permute.xlu0 %63
    %vm67 = vcmask 142352
    %68 = vst.msk [vmem:[#allocation2] sm:$0xf] %vm67, %v62
    %69 = vst.msk [vmem:[#allocation2 + $0x4] sm:$0xf] %vm67, %v64
    %v70 = vld [vmem:[#allocation2] sm:$0x1]
    %v71 = vld [vmem:[#allocation2 + $0x4] sm:$0x1]
    %v72 = vld [vmem:[#allocation2 + $0x1] sm:$0x1]
    %v73 = vld [vmem:[#allocation2 + $0x5] sm:$0x1]
    %v74 = vld [vmem:[#allocation2 + $0x2] sm:$0x1]
    %v75 = vld [vmem:[#allocation2 + $0x6] sm:$0x1]
    %v76 = vld [vmem:[#allocation2 + $0x3] sm:$0x1]
    %v77 = vld [vmem:[#allocation2 + $0x7] sm:$0x1]
    %s78 = sld [smem:[#allocation8]]
    %v79 = vstv %s78
    %s80 = sld [smem:[#allocation7]]
    %v81 = vstv %s80
    %v82 = vmul.f32 %v81, %v70
    %v83 = vmul.f32 %v81, %v71
    %v84 = vadd.f32 %v79, %v82
    %v85 = vadd.f32 %v79, %v83
    %s86 = sld [smem:[#allocation7 + $0x1]]
    %v87 = vstv %s86
    %v88 = vmul.f32 %v87, %v70
    %v89 = vmul.f32 %v87, %v71
    %92 = vrot.lane.b32.xlu0 %v88, 127
    %v93 = vpop.permute.xlu0 %92
    %94 = vrot.lane.b32.xlu0 %v89, 127
    %v95 = vpop.permute.xlu0 %94
    %v98 = vadd.f32 %v84, %v93
    %v99 = vadd.f32 %v85, %v95
    %s100 = sld [smem:[#allocation7 + $0x2]]
    %v101 = vstv %s100
    %v102 = vmul.f32 %v101, %v70
    %v103 = vmul.f32 %v101, %v71
    %106 = vrot.lane.b32.xlu0 %v102, 126
    %v107 = vpop.permute.xlu0 %106
    %108 = vrot.lane.b32.xlu0 %v103, 126
    %v109 = vpop.permute.xlu0 %108
    %v112 = vadd.f32 %v98, %v107
    %v113 = vadd.f32 %v99, %v109
    %s114 = sld [smem:[#allocation7 + $0x3]]
    %v115 = vstv %s114
    %v116 = vmul.f32 %v115, %v70
    %v117 = vmul.f32 %v115, %v71
    %120 = vrot.lane.b32.xlu0 %v116, 125
    %v121 = vpop.permute.xlu0 %120
    %122 = vrot.lane.b32.xlu0 %v117, 125
    %v123 = vpop.permute.xlu0 %122
    %v126 = vadd.f32 %v112, %v121
    %v127 = vadd.f32 %v113, %v123
    %s128 = sld [smem:[#allocation7 + $0x4]]
    %v129 = vstv %s128
    %v130 = vmul.f32 %v129, %v70
    %v131 = vmul.f32 %v129, %v71
    %134 = vrot.lane.b32.xlu0 %v130, 124
    %v135 = vpop.permute.xlu0 %134
    %136 = vrot.lane.b32.xlu0 %v131, 124
    %v137 = vpop.permute.xlu0 %136
    %v140 = vadd.f32 %v126, %v135
    %v141 = vadd.f32 %v127, %v137
    %s142 = sld [smem:[#allocation7 + $0x5]]
    %v143 = vstv %s142
    %v144 = vmul.f32 %v143, %v72
    %v145 = vmul.f32 %v143, %v73
    %v146 = vadd.f32 %v140, %v144
    %v147 = vadd.f32 %v141, %v145
    %s148 = sld [smem:[#allocation7 + $0x6]]
    %v149 = vstv %s148
    %v150 = vmul.f32 %v149, %v72
    %v151 = vmul.f32 %v149, %v73
    %154 = vrot.lane.b32.xlu0 %v150, 127
    %v155 = vpop.permute.xlu0 %154
    %156 = vrot.lane.b32.xlu0 %v151, 127
    %v157 = vpop.permute.xlu0 %156
    %v160 = vadd.f32 %v146, %v155
    %v161 = vadd.f32 %v147, %v157
    %s162 = sld [smem:[#allocation7 + $0x7]]
    %v163 = vstv %s162
    %v164 = vmul.f32 %v163, %v72
    %v165 = vmul.f32 %v163, %v73
    %168 = vrot.lane.b32.xlu0 %v164, 126
    %v169 = vpop.permute.xlu0 %168
    %170 = vrot.lane.b32.xlu0 %v165, 126
    %v171 = vpop.permute.xlu0 %170
    %v174 = vadd.f32 %v160, %v169
    %v175 = vadd.f32 %v161, %v171
    %s176 = sld [smem:[#allocation7 + $0x8]]
    %v177 = vstv %s176
    %v178 = vmul.f32 %v177, %v72
    %v179 = vmul.f32 %v177, %v73
    %182 = vrot.lane.b32.xlu0 %v178, 125
    %v183 = vpop.permute.xlu0 %182
    %184 = vrot.lane.b32.xlu0 %v179, 125
    %v185 = vpop.permute.xlu0 %184
    %v188 = vadd.f32 %v174, %v183
    %v189 = vadd.f32 %v175, %v185
    %s190 = sld [smem:[#allocation7 + $0x9]]
    %v191 = vstv %s190
    %v192 = vmul.f32 %v191, %v72
    %v193 = vmul.f32 %v191, %v73
    %196 = vrot.lane.b32.xlu0 %v192, 124
    %v197 = vpop.permute.xlu0 %196
    %198 = vrot.lane.b32.xlu0 %v193, 124
    %v199 = vpop.permute.xlu0 %198
    %v202 = vadd.f32 %v188, %v197
    %v203 = vadd.f32 %v189, %v199
    %s204 = sld [smem:[#allocation7 + $0xa]]
    %v205 = vstv %s204
    %v206 = vmul.f32 %v205, %v74
    %v207 = vmul.f32 %v205, %v75
    %v208 = vadd.f32 %v202, %v206
    %v209 = vadd.f32 %v203, %v207
    %s210 = sld [smem:[#allocation7 + $0xb]]
    %v211 = vstv %s210
    %v212 = vmul.f32 %v211, %v74
    %v213 = vmul.f32 %v211, %v75
    %216 = vrot.lane.b32.xlu0 %v212, 127
    %v217 = vpop.permute.xlu0 %216
    %218 = vrot.lane.b32.xlu0 %v213, 127
    %v219 = vpop.permute.xlu0 %218
    %v222 = vadd.f32 %v208, %v217
    %v223 = vadd.f32 %v209, %v219
    %s224 = sld [smem:[#allocation7 + $0xc]]
    %v225 = vstv %s224
    %v226 = vmul.f32 %v225, %v74
    %v227 = vmul.f32 %v225, %v75
    %230 = vrot.lane.b32.xlu0 %v226, 126
    %v231 = vpop.permute.xlu0 %230
    %232 = vrot.lane.b32.xlu0 %v227, 126
    %v233 = vpop.permute.xlu0 %232
    %v236 = vadd.f32 %v222, %v231
    %v237 = vadd.f32 %v223, %v233
    %s238 = sld [smem:[#allocation7 + $0xd]]
    %v239 = vstv %s238
    %v240 = vmul.f32 %v239, %v74
    %v241 = vmul.f32 %v239, %v75
    %244 = vrot.lane.b32.xlu0 %v240, 125
    %v245 = vpop.permute.xlu0 %244
    %246 = vrot.lane.b32.xlu0 %v241, 125
    %v247 = vpop.permute.xlu0 %246
    %v250 = vadd.f32 %v236, %v245
    %v251 = vadd.f32 %v237, %v247
    %s252 = sld [smem:[#allocation7 + $0xe]]
    %v253 = vstv %s252
    %v254 = vmul.f32 %v253, %v74
    %v255 = vmul.f32 %v253, %v75
    %258 = vrot.lane.b32.xlu0 %v254, 124
    %v259 = vpop.permute.xlu0 %258
    %260 = vrot.lane.b32.xlu0 %v255, 124
    %v261 = vpop.permute.xlu0 %260
    %v264 = vadd.f32 %v250, %v259
    %v265 = vadd.f32 %v251, %v261
    %s266 = sld [smem:[#allocation7 + $0xf]]
    %v267 = vstv %s266
    %v268 = vmul.f32 %v267, %v76
    %v269 = vmul.f32 %v267, %v77
    %v270 = vadd.f32 %v264, %v268
    %v271 = vadd.f32 %v265, %v269
    %s272 = sld [smem:[#allocation7 + $0x10]]
    %v273 = vstv %s272
    %v274 = vmul.f32 %v273, %v76
    %v275 = vmul.f32 %v273, %v77
    %278 = vrot.lane.b32.xlu0 %v274, 127
    %v279 = vpop.permute.xlu0 %278
    %280 = vrot.lane.b32.xlu0 %v275, 127
    %v281 = vpop.permute.xlu0 %280
    %v284 = vadd.f32 %v270, %v279
    %v285 = vadd.f32 %v271, %v281
    %s286 = sld [smem:[#allocation7 + $0x11]]
    %v287 = vstv %s286
    %v288 = vmul.f32 %v287, %v76
    %v289 = vmul.f32 %v287, %v77
    %292 = vrot.lane.b32.xlu0 %v288, 126
    %v293 = vpop.permute.xlu0 %292
    %294 = vrot.lane.b32.xlu0 %v289, 126
    %v295 = vpop.permute.xlu0 %294
    %v298 = vadd.f32 %v284, %v293
    %v299 = vadd.f32 %v285, %v295
    %s300 = sld [smem:[#allocation7 + $0x12]]
    %v301 = vstv %s300
    %v302 = vmul.f32 %v301, %v76
    %v303 = vmul.f32 %v301, %v77
    %306 = vrot.lane.b32.xlu0 %v302, 125
    %v307 = vpop.permute.xlu0 %306
    %308 = vrot.lane.b32.xlu0 %v303, 125
    %v309 = vpop.permute.xlu0 %308
    %v312 = vadd.f32 %v298, %v307
    %v313 = vadd.f32 %v299, %v309
    %s314 = sld [smem:[#allocation7 + $0x13]]
    %v315 = vstv %s314
    %v316 = vmul.f32 %v315, %v76
    %v317 = vmul.f32 %v315, %v77
    %320 = vrot.lane.b32.xlu0 %v316, 124
    %v321 = vpop.permute.xlu0 %320
    %322 = vrot.lane.b32.xlu0 %v317, 124
    %v323 = vpop.permute.xlu0 %322
    %v326 = vadd.f32 %v312, %v321
    %v327 = vadd.f32 %v313, %v323
    %vm328 = vcmask 122880
    %329 = vst.msk [vmem:[#allocation10] sm:$0x1] %vm328, %v326
    %330 = vst.msk [vmem:[#allocation10 + $0x4] sm:$0x1] %vm328, %v327
    %s331 = sld [smem:[#allocation8 + $0x1]]
    %v332 = vstv %s331
    %s333 = sld [smem:[#allocation7 + $0x14]]
    %v334 = vstv %s333
    %v335 = vmul.f32 %v334, %v70
    %v336 = vmul.f32 %v334, %v71
    %v337 = vadd.f32 %v332, %v335
    %v338 = vadd.f32 %v332, %v336
    %s339 = sld [smem:[#allocation7 + $0x15]]
    %v340 = vstv %s339
    %v341 = vmul.f32 %v340, %v70
    %v342 = vmul.f32 %v340, %v71
    %345 = vrot.lane.b32.xlu0 %v341, 127
    %v346 = vpop.permute.xlu0 %345
    %347 = vrot.lane.b32.xlu0 %v342, 127
    %v348 = vpop.permute.xlu0 %347
    %v351 = vadd.f32 %v337, %v346
    %v352 = vadd.f32 %v338, %v348
    %s353 = sld [smem:[#allocation7 + $0x16]]
    %v354 = vstv %s353
    %v355 = vmul.f32 %v354, %v70
    %v356 = vmul.f32 %v354, %v71
    %359 = vrot.lane.b32.xlu0 %v355, 126
    %v360 = vpop.permute.xlu0 %359
    %361 = vrot.lane.b32.xlu0 %v356, 126
    %v362 = vpop.permute.xlu0 %361
    %v365 = vadd.f32 %v351, %v360
    %v366 = vadd.f32 %v352, %v362
    %s367 = sld [smem:[#allocation7 + $0x17]]
    %v368 = vstv %s367
    %v369 = vmul.f32 %v368, %v70
    %v370 = vmul.f32 %v368, %v71
    %373 = vrot.lane.b32.xlu0 %v369, 125
    %v374 = vpop.permute.xlu0 %373
    %375 = vrot.lane.b32.xlu0 %v370, 125
    %v376 = vpop.permute.xlu0 %375
    %v379 = vadd.f32 %v365, %v374
    %v380 = vadd.f32 %v366, %v376
    %s381 = sld [smem:[#allocation7 + $0x18]]
    %v382 = vstv %s381
    %v383 = vmul.f32 %v382, %v70
    %v384 = vmul.f32 %v382, %v71
    %387 = vrot.lane.b32.xlu0 %v383, 124
    %v388 = vpop.permute.xlu0 %387
    %389 = vrot.lane.b32.xlu0 %v384, 124
    %v390 = vpop.permute.xlu0 %389
    %v393 = vadd.f32 %v379, %v388
    %v394 = vadd.f32 %v380, %v390
    %s395 = sld [smem:[#allocation7 + $0x19]]
    %v396 = vstv %s395
    %v397 = vmul.f32 %v396, %v72
    %v398 = vmul.f32 %v396, %v73
    %v399 = vadd.f32 %v393, %v397
    %v400 = vadd.f32 %v394, %v398
    %s401 = sld [smem:[#allocation7 + $0x1a]]
    %v402 = vstv %s401
    %v403 = vmul.f32 %v402, %v72
    %v404 = vmul.f32 %v402, %v73
    %407 = vrot.lane.b32.xlu0 %v403, 127
    %v408 = vpop.permute.xlu0 %407
    %409 = vrot.lane.b32.xlu0 %v404, 127
    %v410 = vpop.permute.xlu0 %409
    %v413 = vadd.f32 %v399, %v408
    %v414 = vadd.f32 %v400, %v410
    %s415 = sld [smem:[#allocation7 + $0x1b]]
    %v416 = vstv %s415
    %v417 = vmul.f32 %v416, %v72
    %v418 = vmul.f32 %v416, %v73
    %421 = vrot.lane.b32.xlu0 %v417, 126
    %v422 = vpop.permute.xlu0 %421
    %423 = vrot.lane.b32.xlu0 %v418, 126
    %v424 = vpop.permute.xlu0 %423
    %v427 = vadd.f32 %v413, %v422
    %v428 = vadd.f32 %v414, %v424
    %s429 = sld [smem:[#allocation7 + $0x1c]]
    %v430 = vstv %s429
    %v431 = vmul.f32 %v430, %v72
    %v432 = vmul.f32 %v430, %v73
    %435 = vrot.lane.b32.xlu0 %v431, 125
    %v436 = vpop.permute.xlu0 %435
    %437 = vrot.lane.b32.xlu0 %v432, 125
    %v438 = vpop.permute.xlu0 %437
    %v441 = vadd.f32 %v427, %v436
    %v442 = vadd.f32 %v428, %v438
    %s443 = sld [smem:[#allocation7 + $0x1d]]
    %v444 = vstv %s443
    %v445 = vmul.f32 %v444, %v72
    %v446 = vmul.f32 %v444, %v73
    %449 = vrot.lane.b32.xlu0 %v445, 124
    %v450 = vpop.permute.xlu0 %449
    %451 = vrot.lane.b32.xlu0 %v446, 124
    %v452 = vpop.permute.xlu0 %451
    %v455 = vadd.f32 %v441, %v450
    %v456 = vadd.f32 %v442, %v452
    %s457 = sld [smem:[#allocation7 + $0x1e]]
    %v458 = vstv %s457
    %v459 = vmul.f32 %v458, %v74
    %v460 = vmul.f32 %v458, %v75
    %v461 = vadd.f32 %v455, %v459
    %v462 = vadd.f32 %v456, %v460
    %s463 = sld [smem:[#allocation7 + $0x1f]]
    %v464 = vstv %s463
    %v465 = vmul.f32 %v464, %v74
    %v466 = vmul.f32 %v464, %v75
    %469 = vrot.lane.b32.xlu0 %v465, 127
    %v470 = vpop.permute.xlu0 %469
    %471 = vrot.lane.b32.xlu0 %v466, 127
    %v472 = vpop.permute.xlu0 %471
    %v475 = vadd.f32 %v461, %v470
    %v476 = vadd.f32 %v462, %v472
    %s477 = sld [smem:[#allocation7 + $0x20]]
    %v478 = vstv %s477
    %v479 = vmul.f32 %v478, %v74
    %v480 = vmul.f32 %v478, %v75
    %483 = vrot.lane.b32.xlu0 %v479, 126
    %v484 = vpop.permute.xlu0 %483
    %485 = vrot.lane.b32.xlu0 %v480, 126
    %v486 = vpop.permute.xlu0 %485
    %v489 = vadd.f32 %v475, %v484
    %v490 = vadd.f32 %v476, %v486
    %s491 = sld [smem:[#allocation7 + $0x21]]
    %v492 = vstv %s491
    %v493 = vmul.f32 %v492, %v74
    %v494 = vmul.f32 %v492, %v75
    %497 = vrot.lane.b32.xlu0 %v493, 125
    %v498 = vpop.permute.xlu0 %497
    %499 = vrot.lane.b32.xlu0 %v494, 125
    %v500 = vpop.permute.xlu0 %499
    %v503 = vadd.f32 %v489, %v498
    %v504 = vadd.f32 %v490, %v500
    %s505 = sld [smem:[#allocation7 + $0x22]]
    %v506 = vstv %s505
    %v507 = vmul.f32 %v506, %v74
    %v508 = vmul.f32 %v506, %v75
    %511 = vrot.lane.b32.xlu0 %v507, 124
    %v512 = vpop.permute.xlu0 %511
    %513 = vrot.lane.b32.xlu0 %v508, 124
    %v514 = vpop.permute.xlu0 %513
    %v517 = vadd.f32 %v503, %v512
    %v518 = vadd.f32 %v504, %v514
    %s519 = sld [smem:[#allocation7 + $0x23]]
    %v520 = vstv %s519
    %v521 = vmul.f32 %v520, %v76
    %v522 = vmul.f32 %v520, %v77
    %v523 = vadd.f32 %v517, %v521
    %v524 = vadd.f32 %v518, %v522
    %s525 = sld [smem:[#allocation7 + $0x24]]
    %v526 = vstv %s525
    %v527 = vmul.f32 %v526, %v76
    %v528 = vmul.f32 %v526, %v77
    %531 = vrot.lane.b32.xlu0 %v527, 127
    %v532 = vpop.permute.xlu0 %531
    %533 = vrot.lane.b32.xlu0 %v528, 127
    %v534 = vpop.permute.xlu0 %533
    %v537 = vadd.f32 %v523, %v532
    %v538 = vadd.f32 %v524, %v534
    %s539 = sld [smem:[#allocation7 + $0x25]]
    %v540 = vstv %s539
    %v541 = vmul.f32 %v540, %v76
    %v542 = vmul.f32 %v540, %v77
    %545 = vrot.lane.b32.xlu0 %v541, 126
    %v546 = vpop.permute.xlu0 %545
    %547 = vrot.lane.b32.xlu0 %v542, 126
    %v548 = vpop.permute.xlu0 %547
    %v551 = vadd.f32 %v537, %v546
    %v552 = vadd.f32 %v538, %v548
    %s553 = sld [smem:[#allocation7 + $0x26]]
    %v554 = vstv %s553
    %v555 = vmul.f32 %v554, %v76
    %v556 = vmul.f32 %v554, %v77
    %559 = vrot.lane.b32.xlu0 %v555, 125
    %v560 = vpop.permute.xlu0 %559
    %561 = vrot.lane.b32.xlu0 %v556, 125
    %v562 = vpop.permute.xlu0 %561
    %v565 = vadd.f32 %v551, %v560
    %v566 = vadd.f32 %v552, %v562
    %s567 = sld [smem:[#allocation7 + $0x27]]
    %v568 = vstv %s567
    %v569 = vmul.f32 %v568, %v76
    %v570 = vmul.f32 %v568, %v77
    %573 = vrot.lane.b32.xlu0 %v569, 124
    %v574 = vpop.permute.xlu0 %573
    %575 = vrot.lane.b32.xlu0 %v570, 124
    %v576 = vpop.permute.xlu0 %575
    %v579 = vadd.f32 %v565, %v574
    %v580 = vadd.f32 %v566, %v576
    %581 = vst.msk [vmem:[#allocation10 + $0x1] sm:$0x1] %vm328, %v579
    %582 = vst.msk [vmem:[#allocation10 + $0x5] sm:$0x1] %vm328, %v580
    %s583 = sld [smem:[#allocation8 + $0x2]]
    %v584 = vstv %s583
    %s585 = sld [smem:[#allocation7 + $0x28]]
    %v586 = vstv %s585
    %v587 = vmul.f32 %v586, %v70
    %v588 = vmul.f32 %v586, %v71
    %v589 = vadd.f32 %v584, %v587
    %v590 = vadd.f32 %v584, %v588
    %s591 = sld [smem:[#allocation7 + $0x29]]
    %v592 = vstv %s591
    %v593 = vmul.f32 %v592, %v70
    %v594 = vmul.f32 %v592, %v71
    %597 = vrot.lane.b32.xlu0 %v593, 127
    %v598 = vpop.permute.xlu0 %597
    %599 = vrot.lane.b32.xlu0 %v594, 127
    %v600 = vpop.permute.xlu0 %599
    %v603 = vadd.f32 %v589, %v598
    %v604 = vadd.f32 %v590, %v600
    %s605 = sld [smem:[#allocation7 + $0x2a]]
    %v606 = vstv %s605
    %v607 = vmul.f32 %v606, %v70
    %v608 = vmul.f32 %v606, %v71
    %611 = vrot.lane.b32.xlu0 %v607, 126
    %v612 = vpop.permute.xlu0 %611
    %613 = vrot.lane.b32.xlu0 %v608, 126
    %v614 = vpop.permute.xlu0 %613
    %v617 = vadd.f32 %v603, %v612
    %v618 = vadd.f32 %v604, %v614
    %s619 = sld [smem:[#allocation7 + $0x2b]]
    %v620 = vstv %s619
    %v621 = vmul.f32 %v620, %v70
    %v622 = vmul.f32 %v620, %v71
    %625 = vrot.lane.b32.xlu0 %v621, 125
    %v626 = vpop.permute.xlu0 %625
    %627 = vrot.lane.b32.xlu0 %v622, 125
    %v628 = vpop.permute.xlu0 %627
    %v631 = vadd.f32 %v617, %v626
    %v632 = vadd.f32 %v618, %v628
    %s633 = sld [smem:[#allocation7 + $0x2c]]
    %v634 = vstv %s633
    %v635 = vmul.f32 %v634, %v70
    %v636 = vmul.f32 %v634, %v71
    %639 = vrot.lane.b32.xlu0 %v635, 124
    %v640 = vpop.permute.xlu0 %639
    %641 = vrot.lane.b32.xlu0 %v636, 124
    %v642 = vpop.permute.xlu0 %641
    %v645 = vadd.f32 %v631, %v640
    %v646 = vadd.f32 %v632, %v642
    %s647 = sld [smem:[#allocation7 + $0x2d]]
    %v648 = vstv %s647
    %v649 = vmul.f32 %v648, %v72
    %v650 = vmul.f32 %v648, %v73
    %v651 = vadd.f32 %v645, %v649
    %v652 = vadd.f32 %v646, %v650
    %s653 = sld [smem:[#allocation7 + $0x2e]]
    %v654 = vstv %s653
    %v655 = vmul.f32 %v654, %v72
    %v656 = vmul.f32 %v654, %v73
    %659 = vrot.lane.b32.xlu0 %v655, 127
    %v660 = vpop.permute.xlu0 %659
    %661 = vrot.lane.b32.xlu0 %v656, 127
    %v662 = vpop.permute.xlu0 %661
    %v665 = vadd.f32 %v651, %v660
    %v666 = vadd.f32 %v652, %v662
    %s667 = sld [smem:[#allocation7 + $0x2f]]
    %v668 = vstv %s667
    %v669 = vmul.f32 %v668, %v72
    %v670 = vmul.f32 %v668, %v73
    %673 = vrot.lane.b32.xlu0 %v669, 126
    %v674 = vpop.permute.xlu0 %673
    %675 = vrot.lane.b32.xlu0 %v670, 126
    %v676 = vpop.permute.xlu0 %675
    %v679 = vadd.f32 %v665, %v674
    %v680 = vadd.f32 %v666, %v676
    %s681 = sld [smem:[#allocation7 + $0x30]]
    %v682 = vstv %s681
    %v683 = vmul.f32 %v682, %v72
    %v684 = vmul.f32 %v682, %v73
    %687 = vrot.lane.b32.xlu0 %v683, 125
    %v688 = vpop.permute.xlu0 %687
    %689 = vrot.lane.b32.xlu0 %v684, 125
    %v690 = vpop.permute.xlu0 %689
    %v693 = vadd.f32 %v679, %v688
    %v694 = vadd.f32 %v680, %v690
    %s695 = sld [smem:[#allocation7 + $0x31]]
    %v696 = vstv %s695
    %v697 = vmul.f32 %v696, %v72
    %v698 = vmul.f32 %v696, %v73
    %701 = vrot.lane.b32.xlu0 %v697, 124
    %v702 = vpop.permute.xlu0 %701
    %703 = vrot.lane.b32.xlu0 %v698, 124
    %v704 = vpop.permute.xlu0 %703
    %v707 = vadd.f32 %v693, %v702
    %v708 = vadd.f32 %v694, %v704
    %s709 = sld [smem:[#allocation7 + $0x32]]
    %v710 = vstv %s709
    %v711 = vmul.f32 %v710, %v74
    %v712 = vmul.f32 %v710, %v75
    %v713 = vadd.f32 %v707, %v711
    %v714 = vadd.f32 %v708, %v712
    %s715 = sld [smem:[#allocation7 + $0x33]]
    %v716 = vstv %s715
    %v717 = vmul.f32 %v716, %v74
    %v718 = vmul.f32 %v716, %v75
    %721 = vrot.lane.b32.xlu0 %v717, 127
    %v722 = vpop.permute.xlu0 %721
    %723 = vrot.lane.b32.xlu0 %v718, 127
    %v724 = vpop.permute.xlu0 %723
    %v727 = vadd.f32 %v713, %v722
    %v728 = vadd.f32 %v714, %v724
    %s729 = sld [smem:[#allocation7 + $0x34]]
    %v730 = vstv %s729
    %v731 = vmul.f32 %v730, %v74
    %v732 = vmul.f32 %v730, %v75
    %735 = vrot.lane.b32.xlu0 %v731, 126
    %v736 = vpop.permute.xlu0 %735
    %737 = vrot.lane.b32.xlu0 %v732, 126
    %v738 = vpop.permute.xlu0 %737
    %v741 = vadd.f32 %v727, %v736
    %v742 = vadd.f32 %v728, %v738
    %s743 = sld [smem:[#allocation7 + $0x35]]
    %v744 = vstv %s743
    %v745 = vmul.f32 %v744, %v74
    %v746 = vmul.f32 %v744, %v75
    %749 = vrot.lane.b32.xlu0 %v745, 125
    %v750 = vpop.permute.xlu0 %749
    %751 = vrot.lane.b32.xlu0 %v746, 125
    %v752 = vpop.permute.xlu0 %751
    %v755 = vadd.f32 %v741, %v750
    %v756 = vadd.f32 %v742, %v752
    %s757 = sld [smem:[#allocation7 + $0x36]]
    %v758 = vstv %s757
    %v759 = vmul.f32 %v758, %v74
    %v760 = vmul.f32 %v758, %v75
    %763 = vrot.lane.b32.xlu0 %v759, 124
    %v764 = vpop.permute.xlu0 %763
    %765 = vrot.lane.b32.xlu0 %v760, 124
    %v766 = vpop.permute.xlu0 %765
    %v769 = vadd.f32 %v755, %v764
    %v770 = vadd.f32 %v756, %v766
    %s771 = sld [smem:[#allocation7 + $0x37]]
    %v772 = vstv %s771
    %v773 = vmul.f32 %v772, %v76
    %v774 = vmul.f32 %v772, %v77
    %v775 = vadd.f32 %v769, %v773
    %v776 = vadd.f32 %v770, %v774
    %s777 = sld [smem:[#allocation7 + $0x38]]
    %v778 = vstv %s777
    %v779 = vmul.f32 %v778, %v76
    %v780 = vmul.f32 %v778, %v77
    %783 = vrot.lane.b32.xlu0 %v779, 127
    %v784 = vpop.permute.xlu0 %783
    %785 = vrot.lane.b32.xlu0 %v780, 127
    %v786 = vpop.permute.xlu0 %785
    %v789 = vadd.f32 %v775, %v784
    %v790 = vadd.f32 %v776, %v786
    %s791 = sld [smem:[#allocation7 + $0x39]]
    %v792 = vstv %s791
    %v793 = vmul.f32 %v792, %v76
    %v794 = vmul.f32 %v792, %v77
    %797 = vrot.lane.b32.xlu0 %v793, 126
    %v798 = vpop.permute.xlu0 %797
    %799 = vrot.lane.b32.xlu0 %v794, 126
    %v800 = vpop.permute.xlu0 %799
    %v803 = vadd.f32 %v789, %v798
    %v804 = vadd.f32 %v790, %v800
    %s805 = sld [smem:[#allocation7 + $0x3a]]
    %v806 = vstv %s805
    %v807 = vmul.f32 %v806, %v76
    %v808 = vmul.f32 %v806, %v77
    %811 = vrot.lane.b32.xlu0 %v807, 125
    %v812 = vpop.permute.xlu0 %811
    %813 = vrot.lane.b32.xlu0 %v808, 125
    %v814 = vpop.permute.xlu0 %813
    %v817 = vadd.f32 %v803, %v812
    %v818 = vadd.f32 %v804, %v814
    %s819 = sld [smem:[#allocation7 + $0x3b]]
    %v820 = vstv %s819
    %v821 = vmul.f32 %v820, %v76
    %v822 = vmul.f32 %v820, %v77
    %825 = vrot.lane.b32.xlu0 %v821, 124
    %v826 = vpop.permute.xlu0 %825
    %827 = vrot.lane.b32.xlu0 %v822, 124
    %v828 = vpop.permute.xlu0 %827
    %v831 = vadd.f32 %v817, %v826
    %v832 = vadd.f32 %v818, %v828
    %833 = vst.msk [vmem:[#allocation10 + $0x2] sm:$0x1] %vm328, %v831
    %834 = vst.msk [vmem:[#allocation10 + $0x6] sm:$0x1] %vm328, %v832
    %s835 = sld [smem:[#allocation8 + $0x3]]
    %v836 = vstv %s835
    %s837 = sld [smem:[#allocation7 + $0x3c]]
    %v838 = vstv %s837
    %v839 = vmul.f32 %v838, %v70
    %v840 = vmul.f32 %v838, %v71
    %v841 = vadd.f32 %v836, %v839
    %v842 = vadd.f32 %v836, %v840
    %s843 = sld [smem:[#allocation7 + $0x3d]]
    %v844 = vstv %s843
    %v845 = vmul.f32 %v844, %v70
    %v846 = vmul.f32 %v844, %v71
    %849 = vrot.lane.b32.xlu0 %v845, 127
    %v850 = vpop.permute.xlu0 %849
    %851 = vrot.lane.b32.xlu0 %v846, 127
    %v852 = vpop.permute.xlu0 %851
    %v855 = vadd.f32 %v841, %v850
    %v856 = vadd.f32 %v842, %v852
    %s857 = sld [smem:[#allocation7 + $0x3e]]
    %v858 = vstv %s857
    %v859 = vmul.f32 %v858, %v70
    %v860 = vmul.f32 %v858, %v71
    %863 = vrot.lane.b32.xlu0 %v859, 126
    %v864 = vpop.permute.xlu0 %863
    %865 = vrot.lane.b32.xlu0 %v860, 126
    %v866 = vpop.permute.xlu0 %865
    %v869 = vadd.f32 %v855, %v864
    %v870 = vadd.f32 %v856, %v866
    %s871 = sld [smem:[#allocation7 + $0x3f]]
    %v872 = vstv %s871
    %v873 = vmul.f32 %v872, %v70
    %v874 = vmul.f32 %v872, %v71
    %877 = vrot.lane.b32.xlu0 %v873, 125
    %v878 = vpop.permute.xlu0 %877
    %879 = vrot.lane.b32.xlu0 %v874, 125
    %v880 = vpop.permute.xlu0 %879
    %v883 = vadd.f32 %v869, %v878
    %v884 = vadd.f32 %v870, %v880
    %s885 = sld [smem:[#allocation7 + $0x40]]
    %v886 = vstv %s885
    %v887 = vmul.f32 %v886, %v70
    %v888 = vmul.f32 %v886, %v71
    %891 = vrot.lane.b32.xlu0 %v887, 124
    %v892 = vpop.permute.xlu0 %891
    %893 = vrot.lane.b32.xlu0 %v888, 124
    %v894 = vpop.permute.xlu0 %893
    %v897 = vadd.f32 %v883, %v892
    %v898 = vadd.f32 %v884, %v894
    %s899 = sld [smem:[#allocation7 + $0x41]]
    %v900 = vstv %s899
    %v901 = vmul.f32 %v900, %v72
    %v902 = vmul.f32 %v900, %v73
    %v903 = vadd.f32 %v897, %v901
    %v904 = vadd.f32 %v898, %v902
    %s905 = sld [smem:[#allocation7 + $0x42]]
    %v906 = vstv %s905
    %v907 = vmul.f32 %v906, %v72
    %v908 = vmul.f32 %v906, %v73
    %911 = vrot.lane.b32.xlu0 %v907, 127
    %v912 = vpop.permute.xlu0 %911
    %913 = vrot.lane.b32.xlu0 %v908, 127
    %v914 = vpop.permute.xlu0 %913
    %v917 = vadd.f32 %v903, %v912
    %v918 = vadd.f32 %v904, %v914
    %s919 = sld [smem:[#allocation7 + $0x43]]
    %v920 = vstv %s919
    %v921 = vmul.f32 %v920, %v72
    %v922 = vmul.f32 %v920, %v73
    %925 = vrot.lane.b32.xlu0 %v921, 126
    %v926 = vpop.permute.xlu0 %925
    %927 = vrot.lane.b32.xlu0 %v922, 126
    %v928 = vpop.permute.xlu0 %927
    %v931 = vadd.f32 %v917, %v926
    %v932 = vadd.f32 %v918, %v928
    %s933 = sld [smem:[#allocation7 + $0x44]]
    %v934 = vstv %s933
    %v935 = vmul.f32 %v934, %v72
    %v936 = vmul.f32 %v934, %v73
    %939 = vrot.lane.b32.xlu0 %v935, 125
    %v940 = vpop.permute.xlu0 %939
    %941 = vrot.lane.b32.xlu0 %v936, 125
    %v942 = vpop.permute.xlu0 %941
    %v945 = vadd.f32 %v931, %v940
    %v946 = vadd.f32 %v932, %v942
    %s947 = sld [smem:[#allocation7 + $0x45]]
    %v948 = vstv %s947
    %v949 = vmul.f32 %v948, %v72
    %v950 = vmul.f32 %v948, %v73
    %953 = vrot.lane.b32.xlu0 %v949, 124
    %v954 = vpop.permute.xlu0 %953
    %955 = vrot.lane.b32.xlu0 %v950, 124
    %v956 = vpop.permute.xlu0 %955
    %v959 = vadd.f32 %v945, %v954
    %v960 = vadd.f32 %v946, %v956
    %s961 = sld [smem:[#allocation7 + $0x46]]
    %v962 = vstv %s961
    %v963 = vmul.f32 %v962, %v74
    %v964 = vmul.f32 %v962, %v75
    %v965 = vadd.f32 %v959, %v963
    %v966 = vadd.f32 %v960, %v964
    %s967 = sld [smem:[#allocation7 + $0x47]]
    %v968 = vstv %s967
    %v969 = vmul.f32 %v968, %v74
    %v970 = vmul.f32 %v968, %v75
    %973 = vrot.lane.b32.xlu0 %v969, 127
    %v974 = vpop.permute.xlu0 %973
    %975 = vrot.lane.b32.xlu0 %v970, 127
    %v976 = vpop.permute.xlu0 %975
    %v979 = vadd.f32 %v965, %v974
    %v980 = vadd.f32 %v966, %v976
    %s981 = sld [smem:[#allocation7 + $0x48]]
    %v982 = vstv %s981
    %v983 = vmul.f32 %v982, %v74
    %v984 = vmul.f32 %v982, %v75
    %987 = vrot.lane.b32.xlu0 %v983, 126
    %v988 = vpop.permute.xlu0 %987
    %989 = vrot.lane.b32.xlu0 %v984, 126
    %v990 = vpop.permute.xlu0 %989
    %v993 = vadd.f32 %v979, %v988
    %v994 = vadd.f32 %v980, %v990
    %s995 = sld [smem:[#allocation7 + $0x49]]
    %v996 = vstv %s995
    %v997 = vmul.f32 %v996, %v74
    %v998 = vmul.f32 %v996, %v75
    %1001 = vrot.lane.b32.xlu0 %v997, 125
    %v1002 = vpop.permute.xlu0 %1001
    %1003 = vrot.lane.b32.xlu0 %v998, 125
    %v1004 = vpop.permute.xlu0 %1003
    %v1007 = vadd.f32 %v993, %v1002
    %v1008 = vadd.f32 %v994, %v1004
    %s1009 = sld [smem:[#allocation7 + $0x4a]]
    %v1010 = vstv %s1009
    %v1011 = vmul.f32 %v1010, %v74
    %v1012 = vmul.f32 %v1010, %v75
    %1015 = vrot.lane.b32.xlu0 %v1011, 124
    %v1016 = vpop.permute.xlu0 %1015
    %1017 = vrot.lane.b32.xlu0 %v1012, 124
    %v1018 = vpop.permute.xlu0 %1017
    %v1021 = vadd.f32 %v1007, %v1016
    %v1022 = vadd.f32 %v1008, %v1018
    %s1023 = sld [smem:[#allocation7 + $0x4b]]
    %v1024 = vstv %s1023
    %v1025 = vmul.f32 %v1024, %v76
    %v1026 = vmul.f32 %v1024, %v77
    %v1027 = vadd.f32 %v1021, %v1025
    %v1028 = vadd.f32 %v1022, %v1026
    %s1029 = sld [smem:[#allocation7 + $0x4c]]
    %v1030 = vstv %s1029
    %v1031 = vmul.f32 %v1030, %v76
    %v1032 = vmul.f32 %v1030, %v77
    %1035 = vrot.lane.b32.xlu0 %v1031, 127
    %v1036 = vpop.permute.xlu0 %1035
    %1037 = vrot.lane.b32.xlu0 %v1032, 127
    %v1038 = vpop.permute.xlu0 %1037
    %v1041 = vadd.f32 %v1027, %v1036
    %v1042 = vadd.f32 %v1028, %v1038
    %s1043 = sld [smem:[#allocation7 + $0x4d]]
    %v1044 = vstv %s1043
    %v1045 = vmul.f32 %v1044, %v76
    %v1046 = vmul.f32 %v1044, %v77
    %1049 = vrot.lane.b32.xlu0 %v1045, 126
    %v1050 = vpop.permute.xlu0 %1049
    %1051 = vrot.lane.b32.xlu0 %v1046, 126
    %v1052 = vpop.permute.xlu0 %1051
    %v1055 = vadd.f32 %v1041, %v1050
    %v1056 = vadd.f32 %v1042, %v1052
    %s1057 = sld [smem:[#allocation7 + $0x4e]]
    %v1058 = vstv %s1057
    %v1059 = vmul.f32 %v1058, %v76
    %v1060 = vmul.f32 %v1058, %v77
    %1063 = vrot.lane.b32.xlu0 %v1059, 125
    %v1064 = vpop.permute.xlu0 %1063
    %1065 = vrot.lane.b32.xlu0 %v1060, 125
    %v1066 = vpop.permute.xlu0 %1065
    %v1069 = vadd.f32 %v1055, %v1064
    %v1070 = vadd.f32 %v1056, %v1066
    %s1071 = sld [smem:[#allocation7 + $0x4f]]
    %v1072 = vstv %s1071
    %v1073 = vmul.f32 %v1072, %v76
    %v1074 = vmul.f32 %v1072, %v77
    %1077 = vrot.lane.b32.xlu0 %v1073, 124
    %v1078 = vpop.permute.xlu0 %1077
    %1079 = vrot.lane.b32.xlu0 %v1074, 124
    %v1080 = vpop.permute.xlu0 %1079
    %v1083 = vadd.f32 %v1069, %v1078
    %v1084 = vadd.f32 %v1070, %v1080
    %1085 = vst.msk [vmem:[#allocation10 + $0x3] sm:$0x1] %vm328, %v1083
    %1086 = vst.msk [vmem:[#allocation10 + $0x7] sm:$0x1] %vm328, %v1084
    // Predicated region
    $region26: #{tpu_custom_call.1} parent=1 // pred_check
      _
    $region27: #{tpu_custom_call.1} parent=1 // pred_check_branch
      %1088 = sbr.rel (0) target = $region29
    $region28: #{tpu_custom_call.1} parent=1 // pred_region
      %s1090 = ssub.s32 128, 128
      %1091 = vsyncadd [#allocation5], %s1090
      %s1092 = sshll.u32 [#allocation10], 4
      %s1093 = int_to_ptr.vmem [resolvable:$true] %s1092
      %1098 = dma.vmem_to_hbm [thread:$0]  %s1093, 128, %s3, [#allocation5], 64, 64, 4
    $region29: #{tpu_custom_call.1} parent=1 // pred_fallthru
      _
    // Predicated region
    $region30: #{tpu_custom_call.1} parent=1 // pred_check
      _
    $region31: #{tpu_custom_call.1} parent=1 // pred_check_branch
      %1100 = sbr.rel (0) target = $region33
    $region32: #{tpu_custom_call.1} parent=1 // pred_region
      %1101 = dma.done [#allocation5], 128
    $region33: #{tpu_custom_call.1} parent=1 // pred_fallthru
      _
    %1102 = vsyncpa [#allocation4], 1
    %1103 = vsyncpa [#allocation5], 1
    %1104 = vsyncpa [#allocation6], 1
    %1105 = vsyncpa [#allocation9], 1

</llo_original>
